<compile_context>
chip_gen: v5e
topology: v5e:2x2
jax: 0.10.0
libtpu: 0.0.40
codegen_flags: <defaults>
</compile_context>

<pallas_src>
import functools

import jax
import jax.numpy as jnp
from jax.experimental import pallas as pl
from jax.experimental.pallas import tpu as pltpu


def _temporal_attention_kernel(x_ref, u1_ref, u2_ref, u3_ref, be_ref, ve_ref,
                               o_ref, *, bblk, num_feat):
    # x_ref:  (Bblk, F, T, N)   VMEM (lane axis = N)
    # u1_ref: (1, N)            VMEM
    # u2_ref: (F, 1, N)         VMEM
    # u3_ref: (F,)              SMEM (per-feature scalars)
    # be_ref: (T, T)            VMEM
    # ve_ref: (T, T)            VMEM
    # o_ref:  (T, Bblk*T)       VMEM; column block b holds local batch b's (T,T)
    u1 = u1_ref[...]                                            # (1, N)

    # Per local batch b:
    #   lhs[b, t, n]  = sum_f (sum_n' x[b, n', f, t] * U1[n']) * U2[f, n]
    #   rhsT[b, t, n] = sum_f U3[f] * x[b, n, f, t]
    # built as running sums over the (small) feature axis; every term is a
    # cheap VPU op on lane-dense (T, N) tiles (U1 term is a lane reduce).
    lhs = None
    rhsT = None
    for f in range(num_feat):
        xf = x_ref[:, f, :, :]                                  # (Bblk, T, N)
        y1_f = jnp.sum(xf * u1, axis=-1, keepdims=True)         # (Bblk, T, 1)
        lhs_f = y1_f * u2_ref[f]                                # (Bblk, T, N)
        rhsT_f = u3_ref[f] * xf                                 # (Bblk, T, N)
        lhs = lhs_f if lhs is None else lhs + lhs_f
        rhsT = rhsT_f if rhsT is None else rhsT + rhsT_f

    # product[b, t1, t2] = sum_n lhs[b, t1, n] * rhsT[b, t2, n]   (batched MXU)
    prod = jnp.einsum('btn,bsn->bts', lhs, rhsT,
                      preferred_element_type=jnp.float32)        # (Bblk, T, T)

    # Stack per-batch (T, T) matrices along lanes -> (T, Bblk*T) so the Ve
    # matmul, sigmoid and softmax run once on a lane-dense slab.
    be = be_ref[...]
    cols = [prod[b] + be for b in range(bblk)]
    p_slab = cols[0] if bblk == 1 else jnp.concatenate(cols, axis=1)

    e_slab = jnp.dot(ve_ref[...], jax.nn.sigmoid(p_slab),
                     preferred_element_type=jnp.float32)         # (T, Bblk*T)

    # softmax over dim=1 of (B, T, T)  ==  axis 0 of each per-batch column block
    e_max = jnp.max(e_slab, axis=0, keepdims=True)
    e_exp = jnp.exp(e_slab - e_max)
    denom = jnp.sum(e_exp, axis=0, keepdims=True)
    o_ref[...] = e_exp * pl.reciprocal(denom, approx=False)


def _pick_bblk(batch, per_batch_bytes, vmem_budget_bytes=8 * 1024 * 1024,
               max_bblk=8):
    """Largest divisor of `batch` that fits the VMEM budget (double-buffered x)
    and keeps >= 2 grid steps when batch >= 2 (v7x megacore)."""
    cap = max(1, vmem_budget_bytes // (2 * max(per_batch_bytes, 1)))
    cap = min(cap, max_bblk)
    if batch >= 2:
        cap = min(cap, batch // 2)
    cap = max(cap, 1)
    bblk = 1
    for d in range(1, cap + 1):
        if batch % d == 0:
            bblk = d
    return bblk


def temporal_attention(x, U1, U2, U3, be, Ve):
    """x: (B, N, F_in, T) -> (B, T, T)  (matches TemporalAttentionLayer.forward)."""
    B, N, Fin, T = x.shape

    # Wrapper-side layout plumbing only (no compute hoisting):
    #  - lane axis = N (largest dim) for x,
    #  - parameters pre-shaped so the kernel never transposes.
    x_p = jnp.transpose(x, (0, 2, 3, 1)).astype(jnp.float32)      # (B, F, T, N)
    u1_2d = U1.reshape(1, N).astype(jnp.float32)
    u2_3d = U2.reshape(Fin, 1, N).astype(jnp.float32)
    u3_1d = U3.reshape(Fin).astype(jnp.float32)
    be_2d = be.reshape(T, T).astype(jnp.float32)
    ve_2d = Ve.reshape(T, T).astype(jnp.float32)

    bblk = _pick_bblk(B, Fin * T * N * 4)
    grid = (B // bblk,)

    kernel = functools.partial(_temporal_attention_kernel,
                               bblk=bblk, num_feat=Fin)

    out = pl.pallas_call(
        kernel,
        out_shape=jax.ShapeDtypeStruct((B // bblk, T, bblk * T), jnp.float32),
        grid_spec=pltpu.PrefetchScalarGridSpec(
            num_scalar_prefetch=0,
            grid=grid,
            in_specs=[
                pl.BlockSpec((bblk, Fin, T, N), lambda g: (g, 0, 0, 0)),  # x
                pl.BlockSpec((1, N), lambda g: (0, 0)),                   # U1
                pl.BlockSpec((Fin, 1, N), lambda g: (0, 0, 0)),           # U2
                pl.BlockSpec(memory_space=pltpu.MemorySpace.SMEM),        # U3
                pl.BlockSpec((T, T), lambda g: (0, 0)),                   # be
                pl.BlockSpec((T, T), lambda g: (0, 0)),                   # Ve
            ],
            out_specs=pl.BlockSpec((None, T, bblk * T), lambda g: (g, 0, 0)),
        ),
        compiler_params=pltpu.CompilerParams(
            dimension_semantics=("parallel",),
            vmem_limit_bytes=32 * 1024 * 1024,
        ),
    )(x_p, u1_2d, u2_3d, u3_1d, be_2d, ve_2d)

    # (G, T, Bblk*T) -> (B, T, T)   (lane-dense store, un-stacked in the wrapper)
    out = out.reshape(B // bblk, T, bblk, T)
    out = jnp.transpose(out, (0, 2, 1, 3)).reshape(B, T, T)
    return out


def temporal_attention_reference(x, U1, U2, U3, be, Ve):
    lhs = jnp.matmul(jnp.matmul(jnp.transpose(x, (0, 3, 2, 1)), U1), U2)   # (B, T, N)
    rhs = jnp.einsum('f,bnft->bnt', U3, x)                                 # (B, N, T)
    product = jnp.matmul(lhs, rhs)                                         # (B, T, T)
    e = jnp.matmul(Ve, jax.nn.sigmoid(product + be))                       # (B, T, T)
    return jax.nn.softmax(e, axis=1)


if __name__ == "__main__":
    # Small shapes consistent with the module: x is (B, N, F_in, T)
    B, N, Fin, T = 2, 16, 4, 8

    key = jax.random.PRNGKey(0)
    kx, k1, k2, k3, kb, kv = jax.random.split(key, 6)

    x = jax.random.normal(kx, (B, N, Fin, T), dtype=jnp.float32)
    # Parameters (deterministic synthetic init; PyTorch leaves them uninitialized)
    U1 = jax.random.normal(k1, (N,), dtype=jnp.float32) * 0.1
    U2 = jax.random.normal(k2, (Fin, N), dtype=jnp.float32) * 0.1
    U3 = jax.random.normal(k3, (Fin,), dtype=jnp.float32) * 0.1
    be = jax.random.normal(kb, (1, T, T), dtype=jnp.float32) * 0.1
    Ve = jax.random.normal(kv, (T, T), dtype=jnp.float32) * 0.1

    out = jax.block_until_ready(temporal_attention(x, U1, U2, U3, be, Ve))
    ref = jax.block_until_ready(temporal_attention_reference(x, U1, U2, U3, be, Ve))
    assert out.shape == (B, T, T), out.shape
    assert jnp.allclose(out, ref, atol=1e-5, rtol=1e-5), (
        float(jnp.max(jnp.abs(out - ref))))

    # Also exercise the multi-batch-per-grid-step (Bblk > 1) path.
    B2 = 8
    x2 = jax.random.normal(jax.random.PRNGKey(1), (B2, N, Fin, T),
                           dtype=jnp.float32)
    out2 = jax.block_until_ready(temporal_attention(x2, U1, U2, U3, be, Ve))
    ref2 = jax.block_until_ready(
        temporal_attention_reference(x2, U1, U2, U3, be, Ve))
    assert out2.shape == (B2, T, T), out2.shape
    assert jnp.allclose(out2, ref2, atol=1e-5, rtol=1e-5), (
        float(jnp.max(jnp.abs(out2 - ref2))))

    print("KERNEL_OK")
</pallas_src>

<mosaic_0001>
module attributes {stable_mosaic.version = 11 : i64} {
  func.func @_temporal_attention_kernel(%arg0: i32, %arg1: memref<1x4x8x16xf32, #tpu.memory_space<vmem>>, %arg2: memref<1x16xf32, #tpu.memory_space<vmem>>, %arg3: memref<4x1x16xf32, #tpu.memory_space<vmem>>, %arg4: memref<4xf32, #tpu.memory_space<smem>>, %arg5: memref<8x8xf32, #tpu.memory_space<vmem>>, %arg6: memref<8x8xf32, #tpu.memory_space<vmem>>, %arg7: memref<1x8x8xf32, #tpu.memory_space<vmem>>) attributes {dimension_semantics = [#tpu.dimension_semantics<parallel>], iteration_bounds = array<i64: 2>, scalar_prefetch = 0 : i64, scratch_operands = 0 : i64, tpu.core_type = #tpu.core_type<tc>, window_params = [{transform_indices = @transform_0, window_bounds = array<i64: 1, 4, 8, 16>}, {pipeline_mode = #tpu.pipeline_mode<synchronous>, transform_indices = @transform_1, window_bounds = array<i64: 1, 16>}, {pipeline_mode = #tpu.pipeline_mode<synchronous>, transform_indices = @transform_2, window_bounds = array<i64: 4, 1, 16>}, {transform_indices = @transform_3, window_bounds = array<i64: 4>}, {pipeline_mode = #tpu.pipeline_mode<synchronous>, transform_indices = @transform_4, window_bounds = array<i64: 8, 8>}, {pipeline_mode = #tpu.pipeline_mode<synchronous>, transform_indices = @transform_5, window_bounds = array<i64: 8, 8>}, {transform_indices = @transform_6, window_bounds = array<i64: 1, 8, 8>}]} {
    %c0 = arith.constant 0 : index
    %c0_0 = arith.constant 0 : index
    %0 = vector.load %arg2[%c0, %c0_0] : memref<1x16xf32, #tpu.memory_space<vmem>>, vector<1x16xf32>
    %c0_1 = arith.constant 0 : index
    %c0_2 = arith.constant 0 : index
    %c0_3 = arith.constant 0 : index
    %c0_4 = arith.constant 0 : index
    %1 = vector.load %arg1[%c0_1, %c0_2, %c0_3, %c0_4] : memref<1x4x8x16xf32, #tpu.memory_space<vmem>>, vector<1x1x8x16xf32>
    %2 = vector.shape_cast %1 : vector<1x1x8x16xf32> to vector<1x8x16xf32>
    %3 = vector.shape_cast %0 : vector<1x16xf32> to vector<1x1x16xf32>
    %4 = vector.broadcast %3 : vector<1x1x16xf32> to vector<1x8x16xf32>
    %5 = arith.mulf %2, %4 : vector<1x8x16xf32>
    %cst = arith.constant dense<0.000000e+00> : vector<1x8xf32>
    %6 = vector.multi_reduction <add>, %5, %cst [2] : vector<1x8x16xf32> to vector<1x8xf32>
    %7 = vector.shape_cast %6 : vector<1x8xf32> to vector<1x8x1xf32>
    %c0_5 = arith.constant 0 : index
    %c0_6 = arith.constant 0 : index
    %c0_7 = arith.constant 0 : index
    %8 = vector.load %arg3[%c0_5, %c0_6, %c0_7] : memref<4x1x16xf32, #tpu.memory_space<vmem>>, vector<1x1x16xf32>
    %9 = vector.shape_cast %8 : vector<1x1x16xf32> to vector<1x16xf32>
    %10 = vector.shape_cast %9 : vector<1x16xf32> to vector<1x1x16xf32>
    %11 = vector.broadcast %7 : vector<1x8x1xf32> to vector<1x8x16xf32>
    %12 = vector.broadcast %10 : vector<1x1x16xf32> to vector<1x8x16xf32>
    %13 = arith.mulf %11, %12 : vector<1x8x16xf32>
    %c0_8 = arith.constant 0 : index
    %14 = memref.load %arg4[%c0_8] : memref<4xf32, #tpu.memory_space<smem>>
    %15 = vector.broadcast %14 : f32 to vector<1x8x16xf32>
    %16 = arith.mulf %15, %2 : vector<1x8x16xf32>
    %c0_9 = arith.constant 0 : index
    %c1 = arith.constant 1 : index
    %c0_10 = arith.constant 0 : index
    %c0_11 = arith.constant 0 : index
    %17 = vector.load %arg1[%c0_9, %c1, %c0_10, %c0_11] : memref<1x4x8x16xf32, #tpu.memory_space<vmem>>, vector<1x1x8x16xf32>
    %18 = vector.shape_cast %17 : vector<1x1x8x16xf32> to vector<1x8x16xf32>
    %19 = vector.shape_cast %0 : vector<1x16xf32> to vector<1x1x16xf32>
    %20 = vector.broadcast %19 : vector<1x1x16xf32> to vector<1x8x16xf32>
    %21 = arith.mulf %18, %20 : vector<1x8x16xf32>
    %cst_12 = arith.constant dense<0.000000e+00> : vector<1x8xf32>
    %22 = vector.multi_reduction <add>, %21, %cst_12 [2] : vector<1x8x16xf32> to vector<1x8xf32>
    %23 = vector.shape_cast %22 : vector<1x8xf32> to vector<1x8x1xf32>
    %c1_13 = arith.constant 1 : index
    %c0_14 = arith.constant 0 : index
    %c0_15 = arith.constant 0 : index
    %24 = vector.load %arg3[%c1_13, %c0_14, %c0_15] : memref<4x1x16xf32, #tpu.memory_space<vmem>>, vector<1x1x16xf32>
    %25 = vector.shape_cast %24 : vector<1x1x16xf32> to vector<1x16xf32>
    %26 = vector.shape_cast %25 : vector<1x16xf32> to vector<1x1x16xf32>
    %27 = vector.broadcast %23 : vector<1x8x1xf32> to vector<1x8x16xf32>
    %28 = vector.broadcast %26 : vector<1x1x16xf32> to vector<1x8x16xf32>
    %29 = arith.mulf %27, %28 : vector<1x8x16xf32>
    %c1_16 = arith.constant 1 : index
    %30 = memref.load %arg4[%c1_16] : memref<4xf32, #tpu.memory_space<smem>>
    %31 = vector.broadcast %30 : f32 to vector<1x8x16xf32>
    %32 = arith.mulf %31, %18 : vector<1x8x16xf32>
    %33 = arith.addf %13, %29 : vector<1x8x16xf32>
    %34 = arith.addf %16, %32 : vector<1x8x16xf32>
    %c0_17 = arith.constant 0 : index
    %c2 = arith.constant 2 : index
    %c0_18 = arith.constant 0 : index
    %c0_19 = arith.constant 0 : index
    %35 = vector.load %arg1[%c0_17, %c2, %c0_18, %c0_19] : memref<1x4x8x16xf32, #tpu.memory_space<vmem>>, vector<1x1x8x16xf32>
    %36 = vector.shape_cast %35 : vector<1x1x8x16xf32> to vector<1x8x16xf32>
    %37 = vector.shape_cast %0 : vector<1x16xf32> to vector<1x1x16xf32>
    %38 = vector.broadcast %37 : vector<1x1x16xf32> to vector<1x8x16xf32>
    %39 = arith.mulf %36, %38 : vector<1x8x16xf32>
    %cst_20 = arith.constant dense<0.000000e+00> : vector<1x8xf32>
    %40 = vector.multi_reduction <add>, %39, %cst_20 [2] : vector<1x8x16xf32> to vector<1x8xf32>
    %41 = vector.shape_cast %40 : vector<1x8xf32> to vector<1x8x1xf32>
    %c2_21 = arith.constant 2 : index
    %c0_22 = arith.constant 0 : index
    %c0_23 = arith.constant 0 : index
    %42 = vector.load %arg3[%c2_21, %c0_22, %c0_23] : memref<4x1x16xf32, #tpu.memory_space<vmem>>, vector<1x1x16xf32>
    %43 = vector.shape_cast %42 : vector<1x1x16xf32> to vector<1x16xf32>
    %44 = vector.shape_cast %43 : vector<1x16xf32> to vector<1x1x16xf32>
    %45 = vector.broadcast %41 : vector<1x8x1xf32> to vector<1x8x16xf32>
    %46 = vector.broadcast %44 : vector<1x1x16xf32> to vector<1x8x16xf32>
    %47 = arith.mulf %45, %46 : vector<1x8x16xf32>
    %c2_24 = arith.constant 2 : index
    %48 = memref.load %arg4[%c2_24] : memref<4xf32, #tpu.memory_space<smem>>
    %49 = vector.broadcast %48 : f32 to vector<1x8x16xf32>
    %50 = arith.mulf %49, %36 : vector<1x8x16xf32>
    %51 = arith.addf %33, %47 : vector<1x8x16xf32>
    %52 = arith.addf %34, %50 : vector<1x8x16xf32>
    %c0_25 = arith.constant 0 : index
    %c3 = arith.constant 3 : index
    %c0_26 = arith.constant 0 : index
    %c0_27 = arith.constant 0 : index
    %53 = vector.load %arg1[%c0_25, %c3, %c0_26, %c0_27] : memref<1x4x8x16xf32, #tpu.memory_space<vmem>>, vector<1x1x8x16xf32>
    %54 = vector.shape_cast %53 : vector<1x1x8x16xf32> to vector<1x8x16xf32>
    %55 = vector.shape_cast %0 : vector<1x16xf32> to vector<1x1x16xf32>
    %56 = vector.broadcast %55 : vector<1x1x16xf32> to vector<1x8x16xf32>
    %57 = arith.mulf %54, %56 : vector<1x8x16xf32>
    %cst_28 = arith.constant dense<0.000000e+00> : vector<1x8xf32>
    %58 = vector.multi_reduction <add>, %57, %cst_28 [2] : vector<1x8x16xf32> to vector<1x8xf32>
    %59 = vector.shape_cast %58 : vector<1x8xf32> to vector<1x8x1xf32>
    %c3_29 = arith.constant 3 : index
    %c0_30 = arith.constant 0 : index
    %c0_31 = arith.constant 0 : index
    %60 = vector.load %arg3[%c3_29, %c0_30, %c0_31] : memref<4x1x16xf32, #tpu.memory_space<vmem>>, vector<1x1x16xf32>
    %61 = vector.shape_cast %60 : vector<1x1x16xf32> to vector<1x16xf32>
    %62 = vector.shape_cast %61 : vector<1x16xf32> to vector<1x1x16xf32>
    %63 = vector.broadcast %59 : vector<1x8x1xf32> to vector<1x8x16xf32>
    %64 = vector.broadcast %62 : vector<1x1x16xf32> to vector<1x8x16xf32>
    %65 = arith.mulf %63, %64 : vector<1x8x16xf32>
    %c3_32 = arith.constant 3 : index
    %66 = memref.load %arg4[%c3_32] : memref<4xf32, #tpu.memory_space<smem>>
    %67 = vector.broadcast %66 : f32 to vector<1x8x16xf32>
    %68 = arith.mulf %67, %54 : vector<1x8x16xf32>
    %69 = arith.addf %51, %65 : vector<1x8x16xf32>
    %70 = arith.addf %52, %68 : vector<1x8x16xf32>
    "tpu.trace_start"() <{level = 10 : i32, message = "btn,bsn->bts"}> : () -> ()
    %cst_33 = arith.constant dense<0.000000e+00> : vector<1x8x8xf32>
    %71 = tpu.matmul %69, %70, %cst_33 {dimension_numbers = #tpu.dot_dimension_numbers<[2], [2], [1], [1], [0, 0, 0, 1, 1, 1], [0], [0]>} : vector<1x8x16xf32>, vector<1x8x16xf32>, vector<1x8x8xf32> -> vector<1x8x8xf32>
    "tpu.trace_stop"() : () -> ()
    %c0_34 = arith.constant 0 : index
    %c0_35 = arith.constant 0 : index
    %72 = vector.load %arg5[%c0_34, %c0_35] : memref<8x8xf32, #tpu.memory_space<vmem>>, vector<8x8xf32>
    %73 = vector.shape_cast %71 : vector<1x8x8xf32> to vector<8x8xf32>
    %74 = arith.addf %73, %72 : vector<8x8xf32>
    %c0_36 = arith.constant 0 : index
    %c0_37 = arith.constant 0 : index
    %75 = vector.load %arg6[%c0_36, %c0_37] : memref<8x8xf32, #tpu.memory_space<vmem>>, vector<8x8xf32>
    %76 = arith.negf %74 : vector<8x8xf32>
    %77 = math.exp %76 : vector<8x8xf32>
    %cst_38 = arith.constant 1.000000e+00 : f32
    %78 = vector.broadcast %cst_38 : f32 to vector<8x8xf32>
    %79 = arith.addf %78, %77 : vector<8x8xf32>
    %80 = arith.divf %78, %79 : vector<8x8xf32>
    %cst_39 = arith.constant dense<0.000000e+00> : vector<8x8xf32>
    %81 = tpu.matmul %75, %80, %cst_39 {dimension_numbers = #tpu.dot_dimension_numbers<[1], [0], [0], [1], [0, 0, 1, 1], [], []>} : vector<8x8xf32>, vector<8x8xf32>, vector<8x8xf32> -> vector<8x8xf32>
    %cst_40 = arith.constant dense<0xFF800000> : vector<8xf32>
    %82 = vector.multi_reduction <maximumf>, %81, %cst_40 [0] : vector<8x8xf32> to vector<8xf32>
    %83 = vector.shape_cast %82 : vector<8xf32> to vector<1x8xf32>
    %84 = vector.broadcast %83 : vector<1x8xf32> to vector<8x8xf32>
    %85 = arith.subf %81, %84 : vector<8x8xf32>
    %86 = math.exp %85 : vector<8x8xf32>
    %cst_41 = arith.constant dense<0.000000e+00> : vector<8xf32>
    %87 = vector.multi_reduction <add>, %86, %cst_41 [0] : vector<8x8xf32> to vector<8xf32>
    %88 = vector.shape_cast %87 : vector<8xf32> to vector<1x8xf32>
    %89 = tpu.reciprocal %88 : vector<1x8xf32> -> vector<1x8xf32>
    %90 = vector.broadcast %89 : vector<1x8xf32> to vector<8x8xf32>
    %91 = arith.mulf %86, %90 : vector<8x8xf32>
    %c0_42 = arith.constant 0 : index
    %c0_43 = arith.constant 0 : index
    %c0_44 = arith.constant 0 : index
    %92 = vector.load %arg7[%c0_42, %c0_43, %c0_44] : memref<1x8x8xf32, #tpu.memory_space<vmem>>, vector<1x8x8xf32>
    %93 = vector.shape_cast %92 : vector<1x8x8xf32> to vector<8x8xf32>
    %94 = vector.shape_cast %91 : vector<8x8xf32> to vector<1x8x8xf32>
    tpu.vector_store %arg7[%c0_42, %c0_43, %c0_44], %94 {strides = array<i32>} : memref<1x8x8xf32, #tpu.memory_space<vmem>>, vector<1x8x8xf32>,
    return
  }
  func.func @transform_0(%arg0: i32) -> (i32, i32, i32, i32) {
    %c0_i32 = arith.constant 0 : i32
    %c0_i32_0 = arith.constant 0 : i32
    %c0_i32_1 = arith.constant 0 : i32
    %c0_i32_2 = arith.constant 0 : i32
    return %arg0, %c0_i32, %c0_i32_0, %c0_i32_1 : i32, i32, i32, i32
  }
  func.func @transform_1(%arg0: i32) -> (i32, i32) {
    %c0_i32 = arith.constant 0 : i32
    %c0_i32_0 = arith.constant 0 : i32
    %c0_i32_1 = arith.constant 0 : i32
    return %c0_i32, %c0_i32_0 : i32, i32
  }
  func.func @transform_2(%arg0: i32) -> (i32, i32, i32) {
    %c0_i32 = arith.constant 0 : i32
    %c0_i32_0 = arith.constant 0 : i32
    %c0_i32_1 = arith.constant 0 : i32
    %c0_i32_2 = arith.constant 0 : i32
    return %c0_i32, %c0_i32_0, %c0_i32_1 : i32, i32, i32
  }
  func.func @transform_3(%arg0: i32) -> i32 {
    %c0_i32 = arith.constant 0 : i32
    %c0_i32_0 = arith.constant 0 : i32
    return %c0_i32 : i32
  }
  func.func @transform_4(%arg0: i32) -> (i32, i32) {
    %c0_i32 = arith.constant 0 : i32
    %c0_i32_0 = arith.constant 0 : i32
    %c0_i32_1 = arith.constant 0 : i32
    return %c0_i32, %c0_i32_0 : i32, i32
  }
  func.func @transform_5(%arg0: i32) -> (i32, i32) {
    %c0_i32 = arith.constant 0 : i32
    %c0_i32_0 = arith.constant 0 : i32
    %c0_i32_1 = arith.constant 0 : i32
    return %c0_i32, %c0_i32_0 : i32, i32
  }
  func.func @transform_6(%arg0: i32) -> (i32, i32, i32) {
    %c0_i32 = arith.constant 0 : i32
    %c0_i32_0 = arith.constant 0 : i32
    %c0_i32_1 = arith.constant 0 : i32
    return %arg0, %c0_i32, %c0_i32_0 : i32, i32, i32
  }
}

</mosaic_0001>

<llo_original>
// kernel: tpu_custom_call.1
$region0: #{tpu_custom_call.1}
  #allocation0 [shape = 'u32[]', space=smem, size = 0x4, offset = 0x4, fixed_abs, tag = 'smem constant byte address 0x4 - core index']
  #allocation1 [shape = 'u32[72,128]{1,0:T(1,128)}', space=vmem, size = 0x9000, scoped, tag = 'internal scratch']
  %s0 = inlined_call_operand.hbm [shape: f32[2,4,8,16], index: 0, kind: input, shape index: {}]
  %s1 = inlined_call_operand.hbm [shape: f32[1,16], index: 1, kind: input, shape index: {}]
  %s2 = inlined_call_operand.hbm [shape: f32[4,1,16], index: 2, kind: input, shape index: {}]
  %s3 = inlined_call_operand.vmem [shape: f32[4], index: 3, kind: input, shape index: {}]
  %s4 = inlined_call_operand.hbm [shape: f32[8,8], index: 4, kind: input, shape index: {}]
  %s5 = inlined_call_operand.hbm [shape: f32[8,8], index: 5, kind: input, shape index: {}]
  %s6 = inlined_call_operand.hbm [shape: f32[2,8,8], index: 6, kind: output, shape index: {}]
  %s7 = sld [smem:[#allocation0]]
  $region81: #{tpu_custom_call.1} parent=0
    _
  %s9 = ssub.s32 1, %s7
  %s10 = scalar_select 0, %s9, %s7
  $region1: #{tpu_custom_call.1} parent=0
    #allocation2 [shape = 'u8[32768]{0}', space=vmem, size = 0x8000, scoped, tag = 'input window, operand 0']
    #allocation3 [shape = 's32[2]{0}', space=sflag, size = 0x8, scoped, tag = 'scoped memory for tpu_custom_call.1']
    #allocation4 [shape = 's32[2]{0}', space=sflag, size = 0x8, scoped, tag = 'scoped memory for tpu_custom_call.1']
    #allocation5 [shape = 's32[2]{0}', space=sflag, size = 0x8, scoped, tag = 'scoped memory for tpu_custom_call.1']
    #allocation6 [shape = 'u8[512]{0}', space=vmem, size = 0x400, scoped, tag = 'input window, operand 1, single buffered']
    #allocation7 [shape = 's32[1]{0}', space=sflag, size = 0x4, scoped, tag = 'scoped memory for tpu_custom_call.1']
    #allocation8 [shape = 'u8[2048]{0}', space=vmem, size = 0x800, scoped, tag = 'input window, operand 2, single buffered']
    #allocation9 [shape = 'u8[512]{0}', space=smem, size = 0x200, scoped, tag = 'input window, operand 3, single buffered']
    #allocation10 [shape = 'u8[4096]{0}', space=vmem, size = 0x1000, scoped, tag = 'input window, operand 4, single buffered']
    #allocation11 [shape = 's32[1]{0}', space=sflag, size = 0x4, scoped, tag = 'scoped memory for tpu_custom_call.1']
    #allocation12 [shape = 'u8[4096]{0}', space=vmem, size = 0x1000, scoped, tag = 'input window, operand 5, single buffered']
    #allocation13 [shape = 'u8[8192]{0}', space=vmem, size = 0x2000, scoped, tag = 'output window, operand 0']
    %11 = vsyncpa [#allocation3], 0
    %s12 = scalar_lea.sflag [#allocation3], 1
    %13 = vsyncpa %s12, 0
    %14 = vsyncpa [#allocation7], 0
    %15 = vsyncpa [#allocation5], 0
    %16 = vsyncpa [#allocation11], 0
    %17 = vsyncpa [#allocation4], 0
    %s18 = scalar_lea.sflag [#allocation4], 1
    %19 = vsyncpa %s18, 0
    loop: start=0, step=1, limit=4
    $region2: #{tpu_custom_call.1} parent=1 // loop_pre_header
      _
    $region3: #{tpu_custom_call.1} parent=1 // loop_header
      %s21 = sphi 0, %s25
      %p22 = scmp.ge.s32.totalorder %s21, 4
      %s31 = sphi 0, %s33
      %s34 = sphi 0, %s31
      %s35 = sphi 0, %s34
      %s51 = sphi 0, %s35
      %s55 = sphi 0, %s55
      %s57 = sphi 0, %s55
      %s58 = sphi 0, %s57
      %s72 = sphi 0, %s58
      %s76 = sphi 0, %s76
      %s78 = sphi 0, %s76
      %s79 = sphi 0, %s78
      %s93 = sphi 0, %s79
      %s97 = sphi 0, %s97
      %s99 = sphi 0, %s97
      %s100 = sphi 0, %s99
      %s114 = sphi 0, %s100
      %s118 = sphi 0, %s118
      %s120 = sphi 0, %s118
      %s121 = sphi 0, %s120
      %s135 = sphi 0, %s121
      %s139 = sphi 0, %s139
      %s141 = sphi 0, %s139
      %s142 = sphi 0, %s141
      %s156 = sphi 0, %s142
      %s162 = sphi 0, %s164
      %s165 = sphi 0, %s162
      %s166 = sphi 0, %s165
      %s182 = sphi 0, %s166
    $region4: #{tpu_custom_call.1} parent=1 // loop_header_branch
      %24 = sbr.rel (%p22) target = $region8
    $region5: #{tpu_custom_call.1} parent=1 // loop_body
      %s26 = ssub.s32 %s21, 1
      %s27 = ssub.s32 %s21, 2
      %s28 = sadd.s32 %s21, 1
      %s29 = ssub.s32 %s21, %s28
      %p30 = scmp.eq.s32.totalorder %s29, 0
      %s32 = sadd.s32 %s31, 1
      %s33 = scalar_select %p30, %s31, %s32
      %p36 = pneg %p30
      %p37 = scmp.eq.s32.totalorder %s21, 1
      %p38 = por %p36, %p37
      %p39 = scmp.ne.s32.totalorder %s31, %s34
      %p40 = scmp.eq.s32.totalorder %s21, 0
      %p41 = por %p39, %p40
      %p42 = scmp.ne.s32.totalorder %s31, %s34
      %p43 = scmp.eq.s32.totalorder %s26, 1
      %p44 = por %p42, %p43
      %p45 = scmp.ne.s32.totalorder %s34, %s35
      %p46 = scmp.eq.s32.totalorder %s26, 0
      %p47 = por %p45, %p46
      %p48 = scmp.ne.s32.totalorder %s34, %s35
      %p49 = scmp.eq.s32.totalorder %s27, 1
      %p50 = por %p48, %p49
      %p52 = scmp.ne.s32.totalorder %s35, %s51
      %p53 = scmp.eq.s32.totalorder %s27, 0
      %p54 = por %p52, %p53
      %s56 = sadd.s32 %s55, 1
      %p59 = scmp.eq.s32.totalorder %s21, 1
      %p60 = scmp.ne.s32.totalorder %s55, %s57
      %p61 = scmp.eq.s32.totalorder %s21, 0
      %p62 = por %p60, %p61
      %p63 = scmp.ne.s32.totalorder %s55, %s57
      %p64 = scmp.eq.s32.totalorder %s26, 1
      %p65 = por %p63, %p64
      %p66 = scmp.ne.s32.totalorder %s57, %s58
      %p67 = scmp.eq.s32.totalorder %s26, 0
      %p68 = por %p66, %p67
      %p69 = scmp.ne.s32.totalorder %s57, %s58
      %p70 = scmp.eq.s32.totalorder %s27, 1
      %p71 = por %p69, %p70
      %p73 = scmp.ne.s32.totalorder %s58, %s72
      %p74 = scmp.eq.s32.totalorder %s27, 0
      %p75 = por %p73, %p74
      %s77 = sadd.s32 %s76, 1
      %p80 = scmp.eq.s32.totalorder %s21, 1
      %p81 = scmp.ne.s32.totalorder %s76, %s78
      %p82 = scmp.eq.s32.totalorder %s21, 0
      %p83 = por %p81, %p82
      %p84 = scmp.ne.s32.totalorder %s76, %s78
      %p85 = scmp.eq.s32.totalorder %s26, 1
      %p86 = por %p84, %p85
      %p87 = scmp.ne.s32.totalorder %s78, %s79
      %p88 = scmp.eq.s32.totalorder %s26, 0
      %p89 = por %p87, %p88
      %p90 = scmp.ne.s32.totalorder %s78, %s79
      %p91 = scmp.eq.s32.totalorder %s27, 1
      %p92 = por %p90, %p91
      %p94 = scmp.ne.s32.totalorder %s79, %s93
      %p95 = scmp.eq.s32.totalorder %s27, 0
      %p96 = por %p94, %p95
      %s98 = sadd.s32 %s97, 1
      %p101 = scmp.eq.s32.totalorder %s21, 1
      %p102 = scmp.ne.s32.totalorder %s97, %s99
      %p103 = scmp.eq.s32.totalorder %s21, 0
      %p104 = por %p102, %p103
      %p105 = scmp.ne.s32.totalorder %s97, %s99
      %p106 = scmp.eq.s32.totalorder %s26, 1
      %p107 = por %p105, %p106
      %p108 = scmp.ne.s32.totalorder %s99, %s100
      %p109 = scmp.eq.s32.totalorder %s26, 0
      %p110 = por %p108, %p109
      %p111 = scmp.ne.s32.totalorder %s99, %s100
      %p112 = scmp.eq.s32.totalorder %s27, 1
      %p113 = por %p111, %p112
      %p115 = scmp.ne.s32.totalorder %s100, %s114
      %p116 = scmp.eq.s32.totalorder %s27, 0
      %p117 = por %p115, %p116
      %s119 = sadd.s32 %s118, 1
      %p122 = scmp.eq.s32.totalorder %s21, 1
      %p123 = scmp.ne.s32.totalorder %s118, %s120
      %p124 = scmp.eq.s32.totalorder %s21, 0
      %p125 = por %p123, %p124
      %p126 = scmp.ne.s32.totalorder %s118, %s120
      %p127 = scmp.eq.s32.totalorder %s26, 1
      %p128 = por %p126, %p127
      %p129 = scmp.ne.s32.totalorder %s120, %s121
      %p130 = scmp.eq.s32.totalorder %s26, 0
      %p131 = por %p129, %p130
      %p132 = scmp.ne.s32.totalorder %s120, %s121
      %p133 = scmp.eq.s32.totalorder %s27, 1
      %p134 = por %p132, %p133
      %p136 = scmp.ne.s32.totalorder %s121, %s135
      %p137 = scmp.eq.s32.totalorder %s27, 0
      %p138 = por %p136, %p137
      %s140 = sadd.s32 %s139, 1
      %p143 = scmp.eq.s32.totalorder %s21, 1
      %p144 = scmp.ne.s32.totalorder %s139, %s141
      %p145 = scmp.eq.s32.totalorder %s21, 0
      %p146 = por %p144, %p145
      %p147 = scmp.ne.s32.totalorder %s139, %s141
      %p148 = scmp.eq.s32.totalorder %s26, 1
      %p149 = por %p147, %p148
      %p150 = scmp.ne.s32.totalorder %s141, %s142
      %p151 = scmp.eq.s32.totalorder %s26, 0
      %p152 = por %p150, %p151
      %p153 = scmp.ne.s32.totalorder %s141, %s142
      %p154 = scmp.eq.s32.totalorder %s27, 1
      %p155 = por %p153, %p154
      %p157 = scmp.ne.s32.totalorder %s142, %s156
      %p158 = scmp.eq.s32.totalorder %s27, 0
      %p159 = por %p157, %p158
      %s160 = ssub.s32 %s21, %s28
      %p161 = scmp.eq.s32.totalorder %s160, 0
      %s163 = sadd.s32 %s162, 1
      %s164 = scalar_select %p161, %s162, %s163
      %p167 = pneg %p161
      %p168 = scmp.eq.s32.totalorder %s21, 1
      %p169 = por %p167, %p168
      %p170 = scmp.ne.s32.totalorder %s162, %s165
      %p171 = scmp.eq.s32.totalorder %s21, 0
      %p172 = por %p170, %p171
      %p173 = scmp.ne.s32.totalorder %s162, %s165
      %p174 = scmp.eq.s32.totalorder %s26, 1
      %p175 = por %p173, %p174
      %p176 = scmp.ne.s32.totalorder %s165, %s166
      %p177 = scmp.eq.s32.totalorder %s26, 0
      %p178 = por %p176, %p177
      %p179 = scmp.ne.s32.totalorder %s165, %s166
      %p180 = scmp.eq.s32.totalorder %s27, 1
      %p181 = por %p179, %p180
      %p183 = scmp.ne.s32.totalorder %s166, %s182
      %p184 = scmp.eq.s32.totalorder %s27, 0
      %p185 = por %p183, %p184
      %p186 = scmp.le.s32.totalorder 1, %s21
      %p187 = scmp.lt.s32.totalorder %s21, 3
      %p188 = pnand %p186, %p187
      %p189 = pneg %p188
      // Predicated region
      $region9: #{tpu_custom_call.1} parent=5 // pred_check
        _
      $region10: #{tpu_custom_call.1} parent=5 // pred_check_branch
        %191 = sbr.rel (%p188) target = $region12
      $region11: #{tpu_custom_call.1} parent=5 // pred_region
        %s192 = ssub.s32 %s21, 1
        // Predicated region
        $region13: #{tpu_custom_call.1} parent=11 // pred_check
          %p193 = pneg %p68
        $region14: #{tpu_custom_call.1} parent=11 // pred_check_branch
          %195 = sbr.rel (%p193) target = $region16
        $region15: #{tpu_custom_call.1} parent=11 // pred_region
          %197 = vsyncadd [#allocation7], 0
          %s199 = sshll.u32 %s1, 4
          %s200 = int_to_ptr.hbm [resolvable:$true] %s199
          %s201 = sshll.u32 [#allocation6], 4
          %s202 = int_to_ptr.vmem [resolvable:$true] %s201
          %204 = dma.hbm_to_vmem [thread:$0]  %s200, 16, %s202, [#allocation7]
        $region16: #{tpu_custom_call.1} parent=11 // pred_fallthru
          _
        // Predicated region
        $region17: #{tpu_custom_call.1} parent=11 // pred_check
          %p205 = pneg %p89
        $region18: #{tpu_custom_call.1} parent=11 // pred_check_branch
          %207 = sbr.rel (%p205) target = $region20
        $region19: #{tpu_custom_call.1} parent=11 // pred_region
          %209 = vsyncadd [#allocation7], 0
          %s210 = sshll.u32 %s2, 4
          %s211 = int_to_ptr.hbm [resolvable:$true] %s210
          %s212 = sshll.u32 [#allocation8], 4
          %s213 = int_to_ptr.vmem [resolvable:$true] %s212
          %218 = dma.hbm_to_vmem [thread:$0]  %s211, 64, %s213, [#allocation7], 16, 16, 1
        $region20: #{tpu_custom_call.1} parent=11 // pred_fallthru
          _
        // Predicated region
        $region21: #{tpu_custom_call.1} parent=11 // pred_check
          %p219 = pneg %p110
        $region22: #{tpu_custom_call.1} parent=11 // pred_check_branch
          %221 = sbr.rel (%p219) target = $region24
        $region23: #{tpu_custom_call.1} parent=11 // pred_region
          %223 = vsyncadd [#allocation5], 0
          %s225 = sshll.u32 %s3, 4
          %s226 = int_to_ptr.vmem [resolvable:$true] %s225
          %228 = dma.vmem_to_smem %s226, 16, [#allocation9], [#allocation5]
        $region24: #{tpu_custom_call.1} parent=11 // pred_fallthru
          _
        // Predicated region
        $region25: #{tpu_custom_call.1} parent=11 // pred_check
          %p229 = pneg %p131
        $region26: #{tpu_custom_call.1} parent=11 // pred_check_branch
          %231 = sbr.rel (%p229) target = $region28
        $region27: #{tpu_custom_call.1} parent=11 // pred_region
          %233 = vsyncadd [#allocation11], 0
          %s235 = sshll.u32 %s4, 4
          %s236 = int_to_ptr.hbm [resolvable:$true] %s235
          %s237 = sshll.u32 [#allocation10], 4
          %s238 = int_to_ptr.vmem [resolvable:$true] %s237
          %240 = dma.hbm_to_vmem [thread:$0]  %s236, 128, %s238, [#allocation11]
        $region28: #{tpu_custom_call.1} parent=11 // pred_fallthru
          _
        // Predicated region
        $region29: #{tpu_custom_call.1} parent=11 // pred_check
          %p241 = pneg %p152
        $region30: #{tpu_custom_call.1} parent=11 // pred_check_branch
          %243 = sbr.rel (%p241) target = $region32
        $region31: #{tpu_custom_call.1} parent=11 // pred_region
          %245 = vsyncadd [#allocation11], 0
          %s247 = sshll.u32 %s5, 4
          %s248 = int_to_ptr.hbm [resolvable:$true] %s247
          %s249 = sshll.u32 [#allocation12], 4
          %s250 = int_to_ptr.vmem [resolvable:$true] %s249
          %252 = dma.hbm_to_vmem [thread:$0]  %s248, 128, %s250, [#allocation11]
        $region32: #{tpu_custom_call.1} parent=11 // pred_fallthru
          _
      $region12: #{tpu_custom_call.1} parent=5 // pred_fallthru
        _
      %p253 = scmp.lt.s32.totalorder %s21, 2
      // Predicated region
      $region33: #{tpu_custom_call.1} parent=5 // pred_check
        %p254 = pneg %p253
      $region34: #{tpu_custom_call.1} parent=5 // pred_check_branch
        %256 = sbr.rel (%p254) target = $region36
      $region35: #{tpu_custom_call.1} parent=5 // pred_region
        // Predicated region
        $region37: #{tpu_custom_call.1} parent=35 // pred_check
          %p257 = pneg %p41
        $region38: #{tpu_custom_call.1} parent=35 // pred_check_branch
          %259 = sbr.rel (%p257) target = $region40
        $region39: #{tpu_custom_call.1} parent=35 // pred_region
          %s260 = sand.u32 %s31, 1
          %s261 = scalar_lea.sflag [#allocation3], %s260
          %s262 = sand.u32 %s31, 1
          %s263 = smul.addr %s262, 32
          %s264 = scalar_lea.vmem [#allocation2], %s263
          %266 = vsyncadd %s261, 0
          %s267 = smul.addr %s21, 4
          %s268 = smul.addr %s267, 8
          %s269 = scalar_lea.hbm %s0, %s268
          %s270 = sshll.u32 %s269, 4
          %s271 = int_to_ptr.hbm [resolvable:$true] %s270
          %s272 = sshll.u32 %s264, 4
          %s273 = int_to_ptr.vmem [resolvable:$true] %s272
          %278 = dma.hbm_to_vmem [thread:$0]  %s271, 512, %s273, %s261, 128, 128, 8
        $region40: #{tpu_custom_call.1} parent=35 // pred_fallthru
          _
      $region36: #{tpu_custom_call.1} parent=5 // pred_fallthru
        _
      %p279 = scmp.le.s32.totalorder 1, %s21
      %p280 = scmp.lt.s32.totalorder %s21, 3
      %p281 = pnand %p279, %p280
      %p282 = pneg %p281
      // Predicated region
      $region41: #{tpu_custom_call.1} parent=5 // pred_check
        _
      $region42: #{tpu_custom_call.1} parent=5 // pred_check_branch
        %284 = sbr.rel (%p281) target = $region44
      $region43: #{tpu_custom_call.1} parent=5 // pred_region
        %s285 = ssub.s32 %s21, 1
        %s286 = sand.u32 %s34, 1
        %s287 = scalar_lea.sflag [#allocation3], %s286
        %s288 = sand.u32 %s34, 1
        %s289 = smul.addr %s288, 32
        %s290 = scalar_lea.vmem [#allocation2], %s289
        // Predicated region
        $region45: #{tpu_custom_call.1} parent=43 // pred_check
          %p291 = pneg %p47
        $region46: #{tpu_custom_call.1} parent=43 // pred_check_branch
          %293 = sbr.rel (%p291) target = $region48
        $region47: #{tpu_custom_call.1} parent=43 // pred_region
          %295 = dma.done %s287, 512
        $region48: #{tpu_custom_call.1} parent=43 // pred_fallthru
          _
        // Predicated region
        $region49: #{tpu_custom_call.1} parent=43 // pred_check
          %p296 = pneg %p68
        $region50: #{tpu_custom_call.1} parent=43 // pred_check_branch
          %298 = sbr.rel (%p296) target = $region52
        $region51: #{tpu_custom_call.1} parent=43 // pred_region
          %300 = dma.done [#allocation7], 16
        $region52: #{tpu_custom_call.1} parent=43 // pred_fallthru
          _
        // Predicated region
        $region53: #{tpu_custom_call.1} parent=43 // pred_check
          %p301 = pneg %p89
        $region54: #{tpu_custom_call.1} parent=43 // pred_check_branch
          %303 = sbr.rel (%p301) target = $region56
        $region55: #{tpu_custom_call.1} parent=43 // pred_region
          %305 = dma.done [#allocation7], 64
        $region56: #{tpu_custom_call.1} parent=43 // pred_fallthru
          _
        // Predicated region
        $region57: #{tpu_custom_call.1} parent=43 // pred_check
          %p306 = pneg %p110
        $region58: #{tpu_custom_call.1} parent=43 // pred_check_branch
          %308 = sbr.rel (%p306) target = $region60
        $region59: #{tpu_custom_call.1} parent=43 // pred_region
          %310 = dma.done [#allocation5], 16
        $region60: #{tpu_custom_call.1} parent=43 // pred_fallthru
          _
        // Predicated region
        $region61: #{tpu_custom_call.1} parent=43 // pred_check
          %p311 = pneg %p131
        $region62: #{tpu_custom_call.1} parent=43 // pred_check_branch
          %313 = sbr.rel (%p311) target = $region64
        $region63: #{tpu_custom_call.1} parent=43 // pred_region
          %315 = dma.done [#allocation11], 128
        $region64: #{tpu_custom_call.1} parent=43 // pred_fallthru
          _
        // Predicated region
        $region65: #{tpu_custom_call.1} parent=43 // pred_check
          %p316 = pneg %p152
        $region66: #{tpu_custom_call.1} parent=43 // pred_check_branch
          %318 = sbr.rel (%p316) target = $region68
        $region67: #{tpu_custom_call.1} parent=43 // pred_region
          %320 = dma.done [#allocation11], 128
        $region68: #{tpu_custom_call.1} parent=43 // pred_fallthru
          _
        %321 = sfence
        %s322 = sand.u32 %s34, 1
        %s323 = scalar_lea.sflag [#allocation3], %s322
        %s324 = sand.u32 %s34, 1
        %s325 = smul.addr %s324, 32
        %s326 = scalar_lea.vmem [#allocation2], %s325
        %p327 = pneg %p47
        %p328 = pneg %p44
        %p329 = pneg %p68
        %p330 = pneg %p65
        %p331 = pneg %p89
        %p332 = pneg %p86
        %p333 = pneg %p110
        %p334 = pneg %p107
        %p335 = pneg %p131
        %p336 = pneg %p128
        %p337 = pneg %p152
        %p338 = pneg %p149
        %p339 = pneg %p178
        %p340 = pneg %p175
        %s341 = sand.u32 %s165, 1
        %s342 = scalar_lea.sflag [#allocation4], %s341
        %s343 = sand.u32 %s165, 1
        %s344 = smul.addr %s343, 8
        %s345 = scalar_lea.vmem [#allocation13], %s344
        %v346 = vld [vmem:[#allocation6] sm:$0x1]
        %v347 = vld [vmem:[%s290] sm:$0xff]
        %v349 = vperm.slane %v346, 0
        %v351 = vmul.f32 %v347, %v349
        %vm352 = vcmask 130048
        %v353 = vsel %vm352, %v351, 0.0
        %354 = vadd.xlane.f32.xlu0 %v353
        %v355 = vpop.xlane.xlu0 %354
        %v356 = vld [vmem:[#allocation8] sm:$0x1]
        %v358 = vperm.slane %v356, 0
        %v360 = vmul.f32 %v355, %v358
        %s361 = sld [smem:[#allocation9]]
        %v362 = vstv %s361
        %v363 = vmul.f32 %v362, %v347
        %s364 = scalar_lea.vmem %s290, 8 [#allocation2]
        %v365 = vld [vmem:[%s364] sm:$0xff]
        %v366 = vmul.f32 %v365, %v349
        %v367 = vsel %vm352, %v366, 0.0
        %368 = vadd.xlane.f32.xlu0 %v367
        %v369 = vpop.xlane.xlu0 %368
        %s370 = scalar_lea.vmem [#allocation8], 1
        %v371 = vld [vmem:[%s370] sm:$0x1]
        %v373 = vperm.slane %v371, 0
        %v375 = vmul.f32 %v369, %v373
        %s376 = sld [smem:[#allocation9 + $0x1]]
        %v377 = vstv %s376
        %v378 = vmul.f32 %v377, %v365
        %v379 = vadd.f32 %v360, %v375
        %v380 = vadd.f32 %v363, %v378
        %s381 = scalar_lea.vmem %s290, 16 [#allocation2]
        %v382 = vld [vmem:[%s381] sm:$0xff]
        %v383 = vmul.f32 %v382, %v349
        %v384 = vsel %vm352, %v383, 0.0
        %385 = vadd.xlane.f32.xlu0 %v384
        %v386 = vpop.xlane.xlu0 %385
        %s387 = scalar_lea.vmem [#allocation8], 2
        %v388 = vld [vmem:[%s387] sm:$0x1]
        %v390 = vperm.slane %v388, 0
        %v392 = vmul.f32 %v386, %v390
        %s393 = sld [smem:[#allocation9 + $0x2]]
        %v394 = vstv %s393
        %v395 = vmul.f32 %v394, %v382
        %v396 = vadd.f32 %v379, %v392
        %v397 = vadd.f32 %v380, %v395
        %s398 = scalar_lea.vmem %s290, 24 [#allocation2]
        %v399 = vld [vmem:[%s398] sm:$0xff]
        %v400 = vmul.f32 %v399, %v349
        %v401 = vsel %vm352, %v400, 0.0
        %402 = vadd.xlane.f32.xlu0 %v401
        %v403 = vpop.xlane.xlu0 %402
        %s404 = scalar_lea.vmem [#allocation8], 3
        %v405 = vld [vmem:[%s404] sm:$0x1]
        %v407 = vperm.slane %v405, 0
        %v409 = vmul.f32 %v403, %v407
        %s410 = sld [smem:[#allocation9 + $0x3]]
        %v411 = vstv %s410
        %v412 = vmul.f32 %v411, %v399
        %v413 = vadd.f32 %v396, %v409
        %v414 = vadd.f32 %v397, %v412
        %v415 = vld [vmem:[#allocation10] sm:$0xff]
        %v417 = vsel %vm352, %v413, 0
        %v420 = vsel %vm352, %v414, 0
        %422 = vmatpush.xpose.msra.mxu0 0.0
        %423 = vmatpush.xpose.msra.mxu0 0.0
        %424 = vmatpush.xpose.msra.mxu0 0.0
        %425 = vmatpush.xpose.msra.mxu0 0.0
        %426 = vmatpush.xpose.msra.mxu0 0.0
        %427 = vmatpush.xpose.msra.mxu0 0.0
        %428 = vmatpush.xpose.msra.mxu0 0.0
        %429 = vmatpush.xpose.msra.mxu0 0.0
        %430 = vmatpush.xpose.msra.mxu0 0.0
        %431 = vmatpush.xpose.msra.mxu0 0.0
        %432 = vmatpush.xpose.msra.mxu0 0.0
        %433 = vmatpush.xpose.msra.mxu0 0.0
        %434 = vmatpush.xpose.msra.mxu0 0.0
        %435 = vmatpush.xpose.msra.mxu0 0.0
        %436 = vmatpush.xpose.msra.mxu0 0.0
        %437 = vmatpush.xpose.msra.mxu0 %v420
        %438 = vmatmul.f32.gmra.mxu0 %v417
        %v439 = vpop.f32.mrf.mxu0
        %v440 = vadd.f32 %v415, %v439
        %441 = vdwg.mxu0
        %v442 = vld [vmem:[#allocation12] sm:$0xff]
        %v443 = vxor.u32 %v440, 2147483648
        %v444 = vmul.f32 %v443, 1.442695
        %v445 = vpow.pop %v444
        %v446 = vadd.f32 %v445, 1.0
        %v447 = vrcp.pop %v446
        %v448 = vmul.f32 %v446, %v447
        %v449 = vsub.f32 1.0, %v448
        %v450 = vmul.f32 %v447, %v449
        %v451 = vadd.f32 %v447, %v450
        %vm452 = vweird.f32 %v446
        %vm453 = vweird.f32 %v447
        %vm454 = vmor %vm452, %vm453
        %v455 = vsel %vm454, %v447, %v451
        %v456 = vand.u32 2147483647, %v446
        %vm457 = vcmp.eq.f32.partialorder %v456, 8.507059e+37
        %v458 = vand.u32 %v446, 2147483648
        %v459 = vor.u32 1.1754944e-38, %v458
        %v460 = vsel %vm457, %v459, %v455
        %v461 = vmul.f32 1.0, %v460
        %vm462 = vcmask 64512
        %v464 = vsel %vm462, %v442, 0
        %466 = vmatpush.msra.mxu0 0.0
        %467 = vmatpush.msra.mxu0 0.0
        %468 = vmatpush.msra.mxu0 0.0
        %469 = vmatpush.msra.mxu0 0.0
        %470 = vmatpush.msra.mxu0 0.0
        %471 = vmatpush.msra.mxu0 0.0
        %472 = vmatpush.msra.mxu0 0.0
        %473 = vmatpush.msra.mxu0 0.0
        %474 = vmatpush.msra.mxu0 0.0
        %475 = vmatpush.msra.mxu0 0.0
        %476 = vmatpush.msra.mxu0 0.0
        %477 = vmatpush.msra.mxu0 0.0
        %478 = vmatpush.msra.mxu0 0.0
        %479 = vmatpush.msra.mxu0 0.0
        %480 = vmatpush.msra.mxu0 0.0
        %481 = vmatpush.msra.mxu0 %v461
        %482 = vmatmul.f32.gmra.mxu0 %v464
        %v483 = vpop.f32.mrf.mxu0
        %v484 = vadd.f32 0.0, %v483
        %485 = vdwg.mxu0
        %v486 = vsel %vm462, %v484, -inf
        %v487 = vrot.slane %v486, 4
        %v488 = vmax.f32 %v486, %v487
        %v489 = vrot.slane %v488, 2
        %v490 = vmax.f32 %v488, %v489
        %v491 = vrot.slane %v490, 1
        %v492 = vmax.f32 %v490, %v491
        %v493 = vsub.f32 %v484, %v492
        %v494 = vmul.f32 %v493, 1.442695
        %v495 = vpow.pop %v494
        %v496 = vsel %vm462, %v495, 0.0
        %v497 = vrot.slane %v496, 4
        %v498 = vadd.f32 %v496, %v497
        %v499 = vrot.slane %v498, 2
        %v500 = vadd.f32 %v498, %v499
        %v501 = vrot.slane %v500, 1
        %v502 = vadd.f32 %v500, %v501
        %v503 = vrcp.pop %v502
        %v504 = vmul.f32 %v502, %v503
        %v505 = vsub.f32 1.0, %v504
        %v506 = vmul.f32 %v503, %v505
        %v507 = vadd.f32 %v503, %v506
        %vm508 = vweird.f32 %v502
        %vm509 = vweird.f32 %v503
        %vm510 = vmor %vm508, %vm509
        %v511 = vsel %vm510, %v503, %v507
        %v512 = vand.u32 2147483647, %v502
        %vm513 = vcmp.eq.f32.partialorder %v512, 8.507059e+37
        %v514 = vand.u32 %v502, 2147483648
        %v515 = vor.u32 1.1754944e-38, %v514
        %v516 = vsel %vm513, %v515, %v511
        %v517 = vmul.f32 %v495, %v516
        %518 = vst.msk [vmem:[%s345] sm:$0xff] %vm462, %v517
        %s519 = sand.u32 %s165, 1
        %s520 = scalar_lea.sflag [#allocation4], %s519
        %s521 = sand.u32 %s165, 1
        %s522 = smul.addr %s521, 8
        %s523 = scalar_lea.vmem [#allocation13], %s522
        // Predicated region
        $region69: #{tpu_custom_call.1} parent=43 // pred_check
          %p524 = pneg %p175
        $region70: #{tpu_custom_call.1} parent=43 // pred_check_branch
          %526 = sbr.rel (%p524) target = $region72
        $region71: #{tpu_custom_call.1} parent=43 // pred_region
          %528 = vsyncadd %s520, 0
          %s529 = smul.addr %s26, 8
          %s530 = scalar_lea.hbm %s6, %s529
          %s532 = sshll.u32 %s523, 4
          %s533 = int_to_ptr.vmem [resolvable:$true] %s532
          %s534 = sshll.u32 %s530, 4
          %s535 = int_to_ptr.hbm [resolvable:$true] %s534
          %537 = dma.vmem_to_hbm [thread:$0]  %s533, 128, %s535, %s520
        $region72: #{tpu_custom_call.1} parent=43 // pred_fallthru
          _
      $region44: #{tpu_custom_call.1} parent=5 // pred_fallthru
        _
      %p538 = scmp.le.s32.totalorder 2, %s21
      // Predicated region
      $region73: #{tpu_custom_call.1} parent=5 // pred_check
        %p539 = pneg %p538
      $region74: #{tpu_custom_call.1} parent=5 // pred_check_branch
        %541 = sbr.rel (%p539) target = $region76
      $region75: #{tpu_custom_call.1} parent=5 // pred_region
        %s542 = ssub.s32 %s21, 2
        // Predicated region
        $region77: #{tpu_custom_call.1} parent=75 // pred_check
          %p543 = pneg %p181
        $region78: #{tpu_custom_call.1} parent=75 // pred_check_branch
          %545 = sbr.rel (%p543) target = $region80
        $region79: #{tpu_custom_call.1} parent=75 // pred_region
          %s546 = sand.u32 %s166, 1
          %s547 = scalar_lea.sflag [#allocation4], %s546
          %s548 = sand.u32 %s166, 1
          %s549 = smul.addr %s548, 8
          %s550 = scalar_lea.vmem [#allocation13], %s549
          %552 = dma.done %s547, 128
        $region80: #{tpu_custom_call.1} parent=75 // pred_fallthru
          _
      $region76: #{tpu_custom_call.1} parent=5 // pred_fallthru
        _
    $region6: #{tpu_custom_call.1} parent=1 // loop_footer
      %s25 = sadd.s32 1, %s21
    $region7: #{tpu_custom_call.1} parent=1 // loop_footer_branch
      %20 = sbr.rel target = $region3
    $region8: #{tpu_custom_call.1} parent=1 // loop_exit
      _
    %553 = vsyncpa [#allocation3], 1
    %s554 = scalar_lea.sflag [#allocation3], 1
    %555 = vsyncpa %s554, 1
    %556 = vsyncpa [#allocation7], 1
    %557 = vsyncpa [#allocation11], 1
    %558 = vsyncpa [#allocation4], 1
    %s559 = scalar_lea.sflag [#allocation4], 1
    %560 = vsyncpa %s559, 1
    %561 = vsyncpa [#allocation5], 1
    %s562 = scalar_lea.sflag [#allocation5], 1
    %563 = vsyncpa %s562, 1

</llo_original>
